<compile_context>
chip_gen: v6e
topology: v6e:2x2x1
jax: 0.10.0
libtpu: 0.0.40
codegen_flags: <defaults>
</compile_context>

<pallas_src>
import math

import jax
import jax.numpy as jnp
from jax.experimental import pallas as pl
from jax.experimental.pallas import tpu as pltpu


def _token_embedding_kernel(x_ref, w_ref, b_ref, o_ref):
    """Circular Conv1d(kernel_size=3, padding=1) on a (Bt, L, C) batch tile.

    x_ref: (Bt, L, C)   batch tile, channels-last (input dtype, e.g. f32)
    w_ref: (3*C, D)     tap-major weight: rows [0:C)->x[t-1], [C:2C)->x[t], [2C:3C)->x[t+1]
    b_ref: (1, D)       conv bias (f32)
    o_ref: (Bt, L, D)   output tile
    """
    x = x_ref[...]                                         # (Bt, L, C)
    Bt, L, C = x.shape
    Dp = o_ref.shape[-1]
    n = Bt * L

    w = w_ref[...]                                         # (3C, Dp)
    mm_dtype = w.dtype                                     # bf16 when wrapper casts

    # Circular neighbours along the sequence (sublane) axis: XLU rotates, no copies.
    x_prev = pltpu.roll(x, shift=1, axis=1).astype(mm_dtype)       # x[(t-1) % L]
    x_mid = x.astype(mm_dtype)                                     # x[t]
    x_next = pltpu.roll(x, shift=L - 1, axis=1).astype(mm_dtype)   # x[(t+1) % L]

    if C % 128 == 0:
        # MXU-aligned K=C: three accumulating pushes, zero extra data movement.
        acc = jnp.dot(x_prev.reshape(n, C), w[:C],
                      preferred_element_type=jnp.float32)
        acc = acc + jnp.dot(x_mid.reshape(n, C), w[C:2 * C],
                            preferred_element_type=jnp.float32)
        acc = acc + jnp.dot(x_next.reshape(n, C), w[2 * C:],
                            preferred_element_type=jnp.float32)
    else:
        # Small C: fuse taps along the lane axis so the MXU sees one K=3C pass.
        xcat = jnp.concatenate([x_prev, x_mid, x_next], axis=-1).reshape(n, 3 * C)
        acc = jnp.dot(xcat, w, preferred_element_type=jnp.float32)

    acc = acc + b_ref[...]                                 # (1, Dp) broadcast add (VPU)
    o_ref[...] = acc.reshape(Bt, L, Dp).astype(o_ref.dtype)


def _vmem_capacity_bytes() -> int:
    """Generation-aware VMEM capacity (falls back to the smallest, v7x's 64 MiB)."""
    try:
        return int(pltpu.get_tpu_info().vmem_capacity_bytes)
    except Exception:
        return 64 << 20


def _pick_batch_tile(B, L, C, Dp, w_nbytes, io_itemsize, budget_bytes):
    """Largest divisor of B that fits the budget, preferring >=2 (even) grid steps."""

    def per_step_bytes(bt):
        n = bt * L
        in_blk = 2 * n * C * io_itemsize          # double-buffered input block
        out_blk = 2 * n * Dp * io_itemsize        # double-buffered output block
        interm = n * (5 * C + Dp) * 4             # x_prev/x_next/xcat (+casts) + f32 acc
        const = 2 * w_nbytes + 2 * 4 * Dp         # weight + bias streams
        return in_blk + out_blk + interm + const

    cands = [bt for bt in range(B, 0, -1)
             if B % bt == 0 and per_step_bytes(bt) <= budget_bytes]
    if not cands:
        return 1
    if B >= 2:
        multi = [bt for bt in cands if B // bt >= 2]      # keep the pipeline fed
        if multi:
            even = [bt for bt in multi if (B // bt) % 2 == 0]  # v7x: both TCs busy
            return (even or multi)[0]
    return cands[0]


@jax.jit
def token_embedding(x, w_taps, bias):
    """x: (B, L, C); w_taps: (3C, D) tap-major weight; bias: (D,) -> (B, L, D)."""
    B, L, C = x.shape
    K, D = w_taps.shape
    assert K == 3 * C

    # Lane-dense output: pad d_model < 128 up to 128 with zero weight columns.
    Dp = D if D >= 128 else 128
    if Dp != D:
        w_taps = jnp.pad(w_taps, ((0, 0), (0, Dp - D)))
        bias = jnp.pad(bias, (0, Dp - D))
    bias2 = bias.reshape(1, Dp).astype(jnp.float32)

    vmem_cap = _vmem_capacity_bytes()
    budget = min(24 << 20, vmem_cap // 4)
    w_nbytes = w_taps.size * w_taps.dtype.itemsize
    Bt = _pick_batch_tile(B, L, C, Dp, w_nbytes, x.dtype.itemsize, budget)

    out = pl.pallas_call(
        _token_embedding_kernel,
        out_shape=jax.ShapeDtypeStruct((B, L, Dp), x.dtype),
        grid_spec=pltpu.PrefetchScalarGridSpec(
            num_scalar_prefetch=0,
            grid=(B // Bt,),
            in_specs=[
                pl.BlockSpec((Bt, L, C), lambda b: (b, 0, 0)),
                pl.BlockSpec((K, Dp), lambda b: (0, 0)),   # constant: fetched once
                pl.BlockSpec((1, Dp), lambda b: (0, 0)),   # constant: fetched once
            ],
            out_specs=pl.BlockSpec((Bt, L, Dp), lambda b: (b, 0, 0)),
        ),
        compiler_params=pltpu.CompilerParams(
            dimension_semantics=("parallel",),             # batch splits over TCs
            vmem_limit_bytes=min(int(vmem_cap * 3 // 4), 96 << 20),
        ),
        cost_estimate=pl.CostEstimate(
            flops=2 * B * L * K * Dp,
            transcendentals=0,
            bytes_accessed=(x.size * x.dtype.itemsize + w_nbytes + 4 * Dp
                            + B * L * Dp * x.dtype.itemsize),
        ),
    )(x, w_taps, bias2)

    if Dp != D:
        out = out[:, :, :D]
    return out


def reference(x, w_torch, bias):
    """Pure-JAX reference of Conv1d(k=3, pad=1, circular) on channels-last input."""
    x_prev = jnp.roll(x, shift=1, axis=1)
    x_next = jnp.roll(x, shift=-1, axis=1)
    w0 = w_torch[:, :, 0].T          # (C, D)  tap applied to x[t-1]
    w1 = w_torch[:, :, 1].T          # (C, D)  tap applied to x[t]
    w2 = w_torch[:, :, 2].T          # (C, D)  tap applied to x[t+1]
    return x_prev @ w0 + x @ w1 + x_next @ w2 + bias[None, None, :]


if __name__ == "__main__":
    B, L, C, D = 2, 8, 4, 32         # batch, seq_len, c_in, d_model

    key = jax.random.PRNGKey(0)
    kx, kw, kb = jax.random.split(key, 3)

    x = jax.random.normal(kx, (B, L, C), dtype=jnp.float32)

    # Conv1d(c_in=C, d_model=D, kernel_size=3): PyTorch weight shape (D, C, 3).
    # Kaiming-normal (fan_in, leaky_relu): std = sqrt(2/(1+0.01^2)) / sqrt(C*3).
    fan_in = C * 3
    gain = math.sqrt(2.0 / (1.0 + 0.01 ** 2))
    std = gain / math.sqrt(fan_in)
    w_torch = std * jax.random.normal(kw, (D, C, 3), dtype=jnp.float32)
    # default PyTorch Conv1d bias init: U(-1/sqrt(fan_in), 1/sqrt(fan_in))
    bound = 1.0 / math.sqrt(fan_in)
    bias = jax.random.uniform(kb, (D,), dtype=jnp.float32, minval=-bound, maxval=bound)

    # Tap-major (3C, D) weight: rows [0:C)->x[t-1], [C:2C)->x[t], [2C:3C)->x[t+1].
    w_taps = jnp.transpose(w_torch, (2, 1, 0)).reshape(3 * C, D)
    # bf16 matmul operands (f32 accumulation in-kernel): MXU-native, halves weight HBM.
    w_taps_bf16 = w_taps.astype(jnp.bfloat16)

    out = token_embedding(x, w_taps_bf16, bias)
    out = jax.block_until_ready(out)

    ref = reference(x, w_torch, bias)
    assert out.shape == (B, L, D)
    assert jnp.allclose(out, ref, atol=5e-2, rtol=5e-2), "mismatch vs reference"

    print("KERNEL_OK")
</pallas_src>

<mosaic_0001>
module attributes {stable_mosaic.version = 11 : i64} {
  func.func @_token_embedding_kernel(%arg0: i32, %arg1: memref<1x8x4xf32, #tpu.memory_space<vmem>>, %arg2: memref<12x128xbf16, #tpu.memory_space<vmem>>, %arg3: memref<1x128xf32, #tpu.memory_space<vmem>>, %arg4: memref<1x8x128xf32, #tpu.memory_space<vmem>>) attributes {dimension_semantics = [#tpu.dimension_semantics<parallel>], iteration_bounds = array<i64: 2>, scalar_prefetch = 0 : i64, scratch_operands = 0 : i64, tpu.core_type = #tpu.core_type<tc>, window_params = [{transform_indices = @transform_0, window_bounds = array<i64: 1, 8, 4>}, {pipeline_mode = #tpu.pipeline_mode<synchronous>, transform_indices = @transform_1, window_bounds = array<i64: 12, 128>}, {pipeline_mode = #tpu.pipeline_mode<synchronous>, transform_indices = @transform_2, window_bounds = array<i64: 1, 128>}, {transform_indices = @transform_3, window_bounds = array<i64: 1, 8, 128>}]} {
    %c0 = arith.constant 0 : index
    %c0_0 = arith.constant 0 : index
    %c0_1 = arith.constant 0 : index
    %0 = vector.load %arg1[%c0, %c0_0, %c0_1] : memref<1x8x4xf32, #tpu.memory_space<vmem>>, vector<1x8x4xf32>
    %c0_2 = arith.constant 0 : index
    %c0_3 = arith.constant 0 : index
    %1 = vector.load %arg2[%c0_2, %c0_3] : memref<12x128xbf16, #tpu.memory_space<vmem>>, vector<12x128xbf16>
    %c1_i32 = arith.constant 1 : i32
    %2 = tpu.dynamic_rotate %0 by %c1_i32 dim 1 : vector<1x8x4xf32>, i32 -> vector<1x8x4xf32>
    %3 = arith.truncf %2 : vector<1x8x4xf32> to vector<1x8x4xbf16>
    %4 = arith.truncf %0 : vector<1x8x4xf32> to vector<1x8x4xbf16>
    %c7_i32 = arith.constant 7 : i32
    %5 = tpu.dynamic_rotate %0 by %c7_i32 dim 1 : vector<1x8x4xf32>, i32 -> vector<1x8x4xf32>
    %6 = arith.truncf %5 : vector<1x8x4xf32> to vector<1x8x4xbf16>
    %7 = tpu.concatenate %3, %4, %6 in 2 : vector<1x8x4xbf16>, vector<1x8x4xbf16>, vector<1x8x4xbf16> -> vector<1x8x12xbf16>
    %8 = vector.shape_cast %7 : vector<1x8x12xbf16> to vector<8x12xbf16>
    %cst = arith.constant dense<0.000000e+00> : vector<8x128xf32>
    %9 = tpu.matmul %8, %1, %cst {dimension_numbers = #tpu.dot_dimension_numbers<[1], [0], [0], [1], [0, 0, 1, 1], [], []>} : vector<8x12xbf16>, vector<12x128xbf16>, vector<8x128xf32> -> vector<8x128xf32>
    %c0_4 = arith.constant 0 : index
    %c0_5 = arith.constant 0 : index
    %10 = vector.load %arg3[%c0_4, %c0_5] : memref<1x128xf32, #tpu.memory_space<vmem>>, vector<1x128xf32>
    %11 = vector.broadcast %10 : vector<1x128xf32> to vector<8x128xf32>
    %12 = arith.addf %9, %11 : vector<8x128xf32>
    %13 = vector.shape_cast %12 : vector<8x128xf32> to vector<1x8x128xf32>
    %c0_6 = arith.constant 0 : index
    %c0_7 = arith.constant 0 : index
    %c0_8 = arith.constant 0 : index
    %14 = vector.load %arg4[%c0_6, %c0_7, %c0_8] : memref<1x8x128xf32, #tpu.memory_space<vmem>>, vector<1x8x128xf32>
    tpu.vector_store %arg4[%c0_6, %c0_7, %c0_8], %13 {strides = array<i32>} : memref<1x8x128xf32, #tpu.memory_space<vmem>>, vector<1x8x128xf32>,
    return
  }
  func.func @transform_0(%arg0: i32) -> (i32, i32, i32) {
    %c0_i32 = arith.constant 0 : i32
    %c0_i32_0 = arith.constant 0 : i32
    %c0_i32_1 = arith.constant 0 : i32
    return %arg0, %c0_i32, %c0_i32_0 : i32, i32, i32
  }
  func.func @transform_1(%arg0: i32) -> (i32, i32) {
    %c0_i32 = arith.constant 0 : i32
    %c0_i32_0 = arith.constant 0 : i32
    %c0_i32_1 = arith.constant 0 : i32
    return %c0_i32, %c0_i32_0 : i32, i32
  }
  func.func @transform_2(%arg0: i32) -> (i32, i32) {
    %c0_i32 = arith.constant 0 : i32
    %c0_i32_0 = arith.constant 0 : i32
    %c0_i32_1 = arith.constant 0 : i32
    return %c0_i32, %c0_i32_0 : i32, i32
  }
  func.func @transform_3(%arg0: i32) -> (i32, i32, i32) {
    %c0_i32 = arith.constant 0 : i32
    %c0_i32_0 = arith.constant 0 : i32
    %c0_i32_1 = arith.constant 0 : i32
    return %arg0, %c0_i32, %c0_i32_0 : i32, i32, i32
  }
}

</mosaic_0001>

<llo_original>
// kernel: token_embedding.1
$region0: #{token_embedding.1}
  #allocation0 [shape = 'u32[]', space=smem, size = 0x4, offset = 0x4, fixed_abs, tag = 'smem constant byte address 0x4 - core index']
  #allocation1 [shape = 'u32[144,128]{1,0:T(1,128)}', space=vmem, size = 0x12000, scoped, tag = 'internal scratch']
  %s0 = inlined_call_operand.vmem [shape: f32[2,8,4], index: 0, kind: input, shape index: {}]
  %s1 = inlined_call_operand.vmem [shape: bf16[12,128], index: 1, kind: input, shape index: {}]
  %s2 = inlined_call_operand.vmem [shape: f32[1,128], index: 2, kind: input, shape index: {}]
  %s3 = inlined_call_operand.hbm [shape: f32[2,8,128], index: 3, kind: output, shape index: {}]
  %s4 = sld [smem:[#allocation0]]
  $region45: #{token_embedding.1} parent=0
    _
  %s6 = ssub.s32 1, %s4
  %s7 = scalar_select 0, %s6, %s4
  $region1: #{token_embedding.1} parent=0
    #allocation2 [shape = 'u8[8192]{0}', space=vmem, size = 0x2000, scoped, tag = 'output window, operand 0']
    #allocation3 [shape = 's32[2]{0}', space=sflag, size = 0x8, scoped, tag = 'scoped memory for token_embedding.1']
    %8 = vsyncpa [#allocation3], 0
    %s9 = scalar_lea.sflag [#allocation3], 1
    %10 = vsyncpa %s9, 0
    loop: start=0, step=1, limit=4
    $region2: #{token_embedding.1} parent=1 // loop_pre_header
      _
    $region3: #{token_embedding.1} parent=1 // loop_header
      %s12 = sphi 0, %s16
      %p13 = scmp.ge.s32.totalorder %s12, 4
      %s22 = sphi 0, %s24
      %s25 = sphi 0, %s22
      %s26 = sphi 0, %s25
      %s42 = sphi 0, %s26
      %s46 = sphi 0, %s46
      %s48 = sphi 0, %s46
      %s49 = sphi 0, %s48
      %s63 = sphi 0, %s49
      %s67 = sphi 0, %s67
      %s69 = sphi 0, %s67
      %s70 = sphi 0, %s69
      %s84 = sphi 0, %s70
      %s90 = sphi 0, %s92
      %s93 = sphi 0, %s90
      %s94 = sphi 0, %s93
      %s110 = sphi 0, %s94
    $region4: #{token_embedding.1} parent=1 // loop_header_branch
      %15 = sbr.rel (%p13) target = $region8
    $region5: #{token_embedding.1} parent=1 // loop_body
      %s17 = ssub.s32 %s12, 1
      %s18 = ssub.s32 %s12, 2
      %s19 = sadd.s32 %s12, 1
      %s20 = ssub.s32 %s12, %s19
      %p21 = scmp.eq.s32.totalorder %s20, 0
      %s23 = sadd.s32 %s22, 1
      %s24 = scalar_select %p21, %s22, %s23
      %p27 = pneg %p21
      %p28 = scmp.eq.s32.totalorder %s12, 1
      %p29 = por %p27, %p28
      %p30 = scmp.ne.s32.totalorder %s22, %s25
      %p31 = scmp.eq.s32.totalorder %s12, 0
      %p32 = por %p30, %p31
      %p33 = scmp.ne.s32.totalorder %s22, %s25
      %p34 = scmp.eq.s32.totalorder %s17, 1
      %p35 = por %p33, %p34
      %p36 = scmp.ne.s32.totalorder %s25, %s26
      %p37 = scmp.eq.s32.totalorder %s17, 0
      %p38 = por %p36, %p37
      %p39 = scmp.ne.s32.totalorder %s25, %s26
      %p40 = scmp.eq.s32.totalorder %s18, 1
      %p41 = por %p39, %p40
      %p43 = scmp.ne.s32.totalorder %s26, %s42
      %p44 = scmp.eq.s32.totalorder %s18, 0
      %p45 = por %p43, %p44
      %s47 = sadd.s32 %s46, 1
      %p50 = scmp.eq.s32.totalorder %s12, 1
      %p51 = scmp.ne.s32.totalorder %s46, %s48
      %p52 = scmp.eq.s32.totalorder %s12, 0
      %p53 = por %p51, %p52
      %p54 = scmp.ne.s32.totalorder %s46, %s48
      %p55 = scmp.eq.s32.totalorder %s17, 1
      %p56 = por %p54, %p55
      %p57 = scmp.ne.s32.totalorder %s48, %s49
      %p58 = scmp.eq.s32.totalorder %s17, 0
      %p59 = por %p57, %p58
      %p60 = scmp.ne.s32.totalorder %s48, %s49
      %p61 = scmp.eq.s32.totalorder %s18, 1
      %p62 = por %p60, %p61
      %p64 = scmp.ne.s32.totalorder %s49, %s63
      %p65 = scmp.eq.s32.totalorder %s18, 0
      %p66 = por %p64, %p65
      %s68 = sadd.s32 %s67, 1
      %p71 = scmp.eq.s32.totalorder %s12, 1
      %p72 = scmp.ne.s32.totalorder %s67, %s69
      %p73 = scmp.eq.s32.totalorder %s12, 0
      %p74 = por %p72, %p73
      %p75 = scmp.ne.s32.totalorder %s67, %s69
      %p76 = scmp.eq.s32.totalorder %s17, 1
      %p77 = por %p75, %p76
      %p78 = scmp.ne.s32.totalorder %s69, %s70
      %p79 = scmp.eq.s32.totalorder %s17, 0
      %p80 = por %p78, %p79
      %p81 = scmp.ne.s32.totalorder %s69, %s70
      %p82 = scmp.eq.s32.totalorder %s18, 1
      %p83 = por %p81, %p82
      %p85 = scmp.ne.s32.totalorder %s70, %s84
      %p86 = scmp.eq.s32.totalorder %s18, 0
      %p87 = por %p85, %p86
      %s88 = ssub.s32 %s12, %s19
      %p89 = scmp.eq.s32.totalorder %s88, 0
      %s91 = sadd.s32 %s90, 1
      %s92 = scalar_select %p89, %s90, %s91
      %p95 = pneg %p89
      %p96 = scmp.eq.s32.totalorder %s12, 1
      %p97 = por %p95, %p96
      %p98 = scmp.ne.s32.totalorder %s90, %s93
      %p99 = scmp.eq.s32.totalorder %s12, 0
      %p100 = por %p98, %p99
      %p101 = scmp.ne.s32.totalorder %s90, %s93
      %p102 = scmp.eq.s32.totalorder %s17, 1
      %p103 = por %p101, %p102
      %p104 = scmp.ne.s32.totalorder %s93, %s94
      %p105 = scmp.eq.s32.totalorder %s17, 0
      %p106 = por %p104, %p105
      %p107 = scmp.ne.s32.totalorder %s93, %s94
      %p108 = scmp.eq.s32.totalorder %s18, 1
      %p109 = por %p107, %p108
      %p111 = scmp.ne.s32.totalorder %s94, %s110
      %p112 = scmp.eq.s32.totalorder %s18, 0
      %p113 = por %p111, %p112
      %p114 = scmp.le.s32.totalorder 1, %s12
      %p115 = scmp.lt.s32.totalorder %s12, 3
      %p116 = pnand %p114, %p115
      %p117 = pneg %p116
      // Predicated region
      $region9: #{token_embedding.1} parent=5 // pred_check
        _
      $region10: #{token_embedding.1} parent=5 // pred_check_branch
        %119 = sbr.rel (%p116) target = $region12
      $region11: #{token_embedding.1} parent=5 // pred_region
        %s120 = ssub.s32 %s12, 1
        // Predicated region
        $region13: #{token_embedding.1} parent=11 // pred_check
          %p121 = pneg %p59
        $region14: #{token_embedding.1} parent=11 // pred_check_branch
          %123 = sbr.rel (%p121) target = $region16
        $region15: #{token_embedding.1} parent=11 // pred_region
          _
        $region16: #{token_embedding.1} parent=11 // pred_fallthru
          _
        // Predicated region
        $region17: #{token_embedding.1} parent=11 // pred_check
          %p124 = pneg %p80
        $region18: #{token_embedding.1} parent=11 // pred_check_branch
          %126 = sbr.rel (%p124) target = $region20
        $region19: #{token_embedding.1} parent=11 // pred_region
          _
        $region20: #{token_embedding.1} parent=11 // pred_fallthru
          _
      $region12: #{token_embedding.1} parent=5 // pred_fallthru
        _
      %p127 = scmp.lt.s32.totalorder %s12, 2
      // Predicated region
      $region21: #{token_embedding.1} parent=5 // pred_check
        %p128 = pneg %p127
      $region22: #{token_embedding.1} parent=5 // pred_check_branch
        %130 = sbr.rel (%p128) target = $region24
      $region23: #{token_embedding.1} parent=5 // pred_region
        // Predicated region
        $region25: #{token_embedding.1} parent=23 // pred_check
          %p131 = pneg %p32
        $region26: #{token_embedding.1} parent=23 // pred_check_branch
          %133 = sbr.rel (%p131) target = $region28
        $region27: #{token_embedding.1} parent=23 // pred_region
          %p134 = scmp.lt.s32.totalorder %s12, 1
          %s135 = scalar_select %p134, %s12, 1
          %s136 = smul.addr %s135, 8
          %s137 = scalar_lea.vmem %s0, %s136
        $region28: #{token_embedding.1} parent=23 // pred_fallthru
          _
      $region24: #{token_embedding.1} parent=5 // pred_fallthru
        _
      %p138 = scmp.le.s32.totalorder 1, %s12
      %p139 = scmp.lt.s32.totalorder %s12, 3
      %p140 = pnand %p138, %p139
      %p141 = pneg %p140
      // Predicated region
      $region29: #{token_embedding.1} parent=5 // pred_check
        _
      $region30: #{token_embedding.1} parent=5 // pred_check_branch
        %143 = sbr.rel (%p140) target = $region32
      $region31: #{token_embedding.1} parent=5 // pred_region
        %s144 = ssub.s32 %s12, 1
        %p145 = scmp.lt.s32.totalorder %s17, 1
        %s146 = scalar_select %p145, %s17, 1
        %s147 = smul.addr %s146, 8
        %s148 = scalar_lea.vmem %s0, %s147
        %p149 = pneg %p38
        %p150 = pneg %p35
        %p151 = pneg %p59
        %p152 = pneg %p56
        %p153 = pneg %p80
        %p154 = pneg %p77
        %p155 = pneg %p106
        %p156 = pneg %p103
        %s157 = sand.u32 %s93, 1
        %s158 = scalar_lea.sflag [#allocation3], %s157
        %s159 = sand.u32 %s93, 1
        %s160 = smul.addr %s159, 8
        %s161 = scalar_lea.vmem [#allocation2], %s160
        %p162 = scmp.lt.s32.totalorder %s17, 1
        %s163 = scalar_select %p162, %s17, 1
        %s164 = smul.addr %s163, 8
        %s165 = scalar_lea.vmem %s0, %s164
        %v167 = vld [vmem:[%s165] sm:$0xff]
        %v168 = vld [vmem:[%s1] sm:$0xf]
        %v169 = vld [vmem:[%s1 + $0x4] sm:$0x3]
        %v170 = vrot.slane %v167, 7
        %v171 = vpack.c.bf16 %v170, %v170
        %v172 = vpack.c.bf16 %v167, %v167
        %v173 = vrot.slane %v167, 1
        %v174 = vpack.c.bf16 %v173, %v173
        %176 = vrot.lane.b32.xlu0 %v172, 4
        %v177 = vpop.permute.xlu0 %176
        %179 = vrot.lane.b32.xlu0 %v174, 8
        %v180 = vpop.permute.xlu0 %179
        %vm181 = vcmask 31744
        %v184 = vsel %vm181, %v171, %v177
        %vm185 = vcmask 64512
        %v187 = vsel %vm185, %v184, %v180
        %v188 = vld [vmem:[%s2] sm:$0x1]
        %v190 = vlaneseq
        %v191 = vshrl.u32 %v190, 7
        %v192 = vsub.s32 0, %v191
        %v193 = vrot.slane %v188, %v192
        %v197 = vunpack.c.l.b16 %v168
        %v198 = vunpack.c.l.b16 %v169
        %v199 = vpack.c.b16 %v198, %v197
        %vm200 = vcmask 97280
        %v201 = vsel %vm200, %v187, 0
        %vm203 = vcmask 1045504
        %v205 = vsel %vm203, %v199, 0
        %207 = vmatprep.subr.bf16.mxu0 0
        %208 = vmatpush1.bf16.msra.mxu0 0
        %209 = vmatprep.subr.bf16.mxu0 0
        %210 = vmatpush1.bf16.msra.mxu0 0
        %211 = vmatprep.subr.bf16.mxu0 0
        %212 = vmatpush1.bf16.msra.mxu0 0
        %213 = vmatprep.subr.bf16.mxu0 0
        %214 = vmatpush1.bf16.msra.mxu0 0
        %215 = vmatprep.subr.bf16.mxu0 0
        %216 = vmatpush1.bf16.msra.mxu0 0
        %217 = vmatprep.subr.bf16.mxu0 0
        %218 = vmatpush1.bf16.msra.mxu0 0
        %219 = vmatprep.subr.bf16.mxu0 0
        %220 = vmatpush1.bf16.msra.mxu0 0
        %221 = vmatprep.subr.bf16.mxu0 0
        %222 = vmatpush1.bf16.msra.mxu0 %v205
        %223 = vmatprep.subr.bf16.mxu0 0
        %224 = vmatpush2.bf16.msra.mxu0 0
        %225 = vmatprep.subr.bf16.mxu0 0
        %226 = vmatpush2.bf16.msra.mxu0 0
        %227 = vmatprep.subr.bf16.mxu0 0
        %228 = vmatpush2.bf16.msra.mxu0 0
        %229 = vmatprep.subr.bf16.mxu0 0
        %230 = vmatpush2.bf16.msra.mxu0 0
        %231 = vmatprep.subr.bf16.mxu0 0
        %232 = vmatpush2.bf16.msra.mxu0 0
        %233 = vmatprep.subr.bf16.mxu0 0
        %234 = vmatpush2.bf16.msra.mxu0 0
        %235 = vmatprep.subr.bf16.mxu0 0
        %236 = vmatpush2.bf16.msra.mxu0 0
        %237 = vmatprep.subr.bf16.mxu0 0
        %238 = vmatpush2.bf16.msra.mxu0 0
        %239 = vmatprep.mubr.bf16.mxu0 0
        %240 = vmatmul.mubr.bf16.gmra.mxu0 %v201
        %v241 = vpop.f32.mrf.mxu0
        %v242 = vadd.f32 %v193, %v241
        %v243 = vpop.f32.mrf.mxu0
        %v244 = vpop.f32.mrf.mxu0
        %v245 = vpop.f32.mrf.mxu0
        %246 = vdwg.mxu0
        %247 = vst [vmem:[%s161] sm:$0xff] %v242
        %s248 = sand.u32 %s93, 1
        %s249 = scalar_lea.sflag [#allocation3], %s248
        %s250 = sand.u32 %s93, 1
        %s251 = smul.addr %s250, 8
        %s252 = scalar_lea.vmem [#allocation2], %s251
        // Predicated region
        $region33: #{token_embedding.1} parent=31 // pred_check
          %p253 = pneg %p103
        $region34: #{token_embedding.1} parent=31 // pred_check_branch
          %255 = sbr.rel (%p253) target = $region36
        $region35: #{token_embedding.1} parent=31 // pred_region
          %s257 = ssub.s32 128, 128
          %258 = vsyncadd %s249, %s257
          %s259 = smul.addr %s17, 128
          %s260 = scalar_lea.hbm %s3, %s259
          %s262 = sshll.u32 %s252, 4
          %s263 = int_to_ptr.vmem [resolvable:$true] %s262
          %265 = dma.vmem_to_hbm [thread:$0]  %s263, 128, %s260, %s249
        $region36: #{token_embedding.1} parent=31 // pred_fallthru
          _
      $region32: #{token_embedding.1} parent=5 // pred_fallthru
        _
      %p266 = scmp.le.s32.totalorder 2, %s12
      // Predicated region
      $region37: #{token_embedding.1} parent=5 // pred_check
        %p267 = pneg %p266
      $region38: #{token_embedding.1} parent=5 // pred_check_branch
        %269 = sbr.rel (%p267) target = $region40
      $region39: #{token_embedding.1} parent=5 // pred_region
        %s270 = ssub.s32 %s12, 2
        // Predicated region
        $region41: #{token_embedding.1} parent=39 // pred_check
          %p271 = pneg %p109
        $region42: #{token_embedding.1} parent=39 // pred_check_branch
          %273 = sbr.rel (%p271) target = $region44
        $region43: #{token_embedding.1} parent=39 // pred_region
          %s274 = sand.u32 %s94, 1
          %s275 = scalar_lea.sflag [#allocation3], %s274
          %s276 = sand.u32 %s94, 1
          %s277 = smul.addr %s276, 8
          %s278 = scalar_lea.vmem [#allocation2], %s277
          %279 = dma.done %s275, 128
        $region44: #{token_embedding.1} parent=39 // pred_fallthru
          _
      $region40: #{token_embedding.1} parent=5 // pred_fallthru
        _
    $region6: #{token_embedding.1} parent=1 // loop_footer
      %s16 = sadd.s32 1, %s12
    $region7: #{token_embedding.1} parent=1 // loop_footer_branch
      %11 = sbr.rel target = $region3
    $region8: #{token_embedding.1} parent=1 // loop_exit
      _
    %280 = vsyncpa [#allocation3], 1
    %s281 = scalar_lea.sflag [#allocation3], 1
    %282 = vsyncpa %s281, 1

</llo_original>
